<compile_context>
chip_gen: v7x
topology: tpu7x:2x2x1
jax: 0.10.0
libtpu: 0.0.40
codegen_flags: <defaults>
</compile_context>

<pallas_src>
import functools

import jax
import jax.numpy as jnp
from jax import lax
from jax.experimental import pallas as pl
from jax.experimental.pallas import tpu as pltpu

_LANE = 128
_MIB = 1024 * 1024


def _attention_kernel(x_ref, w1t_ref, b1_ref, w2t_ref, b2_ref, o_ref, *, hw, hw_pad):
    # x_ref: (BT, C, HWp)   w1t_ref: (C, HID)   b1_ref: (1, HID)
    # w2t_ref: (HID, C)     b2_ref: (1, C)      o_ref: (BT, C, HWp)
    xv = x_ref[...]                                    # native dtype, no full-tile cast
    bt = xv.shape[0]

    if hw_pad != hw:
        # Zero-padded lanes must not affect the max (-inf) nor the mean
        # (sum of zeros, divide by the true hw).
        lane_idx = lax.broadcasted_iota(jnp.int32, xv.shape, dimension=2)
        valid = lane_idx < hw
        x_max_src = jnp.where(valid, xv, jnp.asarray(-jnp.inf, xv.dtype))
        x_sum_src = jnp.where(valid, xv, jnp.zeros((), xv.dtype))
    else:
        x_max_src = xv
        x_sum_src = xv

    # Pooled per-(batch, channel) stats; small results promoted to f32, lane = C.
    max_f = jnp.max(x_max_src, axis=-1).astype(jnp.float32)         # (BT, C)
    avg_f = jnp.sum(x_sum_src.astype(jnp.float32), axis=-1) / hw    # (BT, C)

    # Shared MLP, lane-dense. Rows 0..BT-1 carry the max path, BT..2BT-1 the avg path.
    cha = jnp.concatenate([max_f, avg_f], axis=0)                   # (2*BT, C)
    h1 = jnp.dot(cha, w1t_ref[...], preferred_element_type=jnp.float32)
    h1 = jnp.maximum(h1 + b1_ref[...], 0.0)                         # (2*BT, HID)
    h2 = jnp.dot(h1, w2t_ref[...], preferred_element_type=jnp.float32)
    h2 = h2 + b2_ref[...]                                           # (2*BT, C)

    attn = jax.nn.sigmoid(h2[:bt, :] + h2[bt:, :])                  # (BT, C)

    # Per-channel scale; multiply in the input dtype (no long-lived f32 tile copy).
    o_ref[...] = (xv * attn.astype(xv.dtype)[:, :, None]).astype(o_ref.dtype)


def _pick_batch_tile(b, per_image_bytes, tile_budget_bytes):
    """Largest divisor of b whose tile fits the budget (>= 1, no batch padding)."""
    bt_max = int(max(1, tile_budget_bytes // max(per_image_bytes, 1)))
    if b <= bt_max:
        return b
    best = 1
    for d in range(1, bt_max + 1):
        if b % d == 0:
            best = d
    return best


def attention_block(x, w1, b1, w2, b2, *, tile_budget_bytes=8 * _MIB):
    """x: (b, c, h, w). w1: (hid, c) = fc1.weight, b1: (hid,), w2: (c, hid), b2: (c,)."""
    b, c, h, w = x.shape
    hid = w1.shape[0]
    hw = h * w
    hw_pad = max(_LANE, ((hw + _LANE - 1) // _LANE) * _LANE)
    itemsize = jnp.dtype(x.dtype).itemsize

    # Images per grid step: amortize per-step overhead while keeping
    # (in + out) x double-buffering comfortably inside scoped VMEM (v7x: 64 MiB).
    per_image_bytes = c * hw_pad * itemsize
    bt = _pick_batch_tile(b, per_image_bytes, tile_budget_bytes)
    # TODO(synk): for very large single images (c*hw_pad alone beyond the VMEM budget),
    # add a two-pass HW-tiled path (pass 1: streaming max/sum reduction per HW tile,
    # pass 2: re-read x tiles and scale) instead of keeping the whole image resident.

    x_flat = x.reshape(b, c, hw)
    pad_hw = hw_pad - hw
    if pad_hw:
        x_flat = jnp.pad(x_flat, ((0, 0), (0, 0), (0, pad_hw)))

    # Lane-dense weight layout: activations are (rows, C), contract over the lane dim.
    w1t = jnp.transpose(w1)           # (c, hid)
    w2t = jnp.transpose(w2)           # (hid, c)
    b1_row = b1.reshape(1, hid)
    b2_row = b2.reshape(1, c)

    tile_bytes = bt * c * hw_pad * itemsize
    weight_bytes = (2 * c * hid + c + hid) * jnp.dtype(w1.dtype).itemsize
    # in + out tiles, double-buffered, plus weights (double-buffered) and headroom.
    vmem_limit = 4 * tile_bytes + 2 * weight_bytes + 2 * _MIB
    vmem_limit = int(min(max(vmem_limit, 16 * _MIB), 120 * _MIB))

    kernel = functools.partial(_attention_kernel, hw=hw, hw_pad=hw_pad)

    out_flat = pl.pallas_call(
        kernel,
        out_shape=jax.ShapeDtypeStruct((b, c, hw_pad), x.dtype),
        grid_spec=pltpu.PrefetchScalarGridSpec(
            num_scalar_prefetch=0,
            grid=(b // bt,),
            in_specs=[
                pl.BlockSpec((bt, c, hw_pad), lambda i: (i, 0, 0)),
                pl.BlockSpec((c, hid), lambda i: (0, 0)),
                pl.BlockSpec((1, hid), lambda i: (0, 0)),
                pl.BlockSpec((hid, c), lambda i: (0, 0)),
                pl.BlockSpec((1, c), lambda i: (0, 0)),
            ],
            out_specs=pl.BlockSpec((bt, c, hw_pad), lambda i: (i, 0, 0)),
        ),
        compiler_params=pltpu.CompilerParams(
            dimension_semantics=("parallel",),
            vmem_limit_bytes=vmem_limit,
        ),
    )(x_flat, w1t, b1_row, w2t, b2_row)

    if pad_hw:
        out_flat = out_flat[:, :, :hw]
    return out_flat.reshape(b, c, h, w)


def attention_block_ref(x, w1, b1, w2, b2):
    """Pure-JAX reference matching the PyTorch forward."""
    b, c, h, w = x.shape
    max_f = jnp.max(x, axis=(2, 3)).reshape(b, 1, c)
    avg_f = jnp.mean(x, axis=(2, 3)).reshape(b, 1, c)
    cha = jnp.concatenate([max_f, avg_f], axis=1)          # (b, 2, c)
    h1 = jnp.maximum(jnp.einsum("bnc,hc->bnh", cha, w1) + b1, 0.0)
    out1 = jnp.einsum("bnh,ch->bnc", h1, w2) + b2
    attn = jax.nn.sigmoid(out1[:, 0, :] + out1[:, 1, :]).reshape(b, c, 1, 1)
    return x * attn


if __name__ == "__main__":
    # Module default: input_channel=64 -> hidden = 64 // 8 = 8; H=W=16 -> HW=256 (lane-dense).
    B, C, H, W = 2, 64, 16, 16
    HID = C // 8

    key = jax.random.PRNGKey(0)
    kx, k1, k2, k3, k4 = jax.random.split(key, 5)

    x = jax.random.normal(kx, (B, C, H, W), dtype=jnp.float32)
    w1 = jax.random.normal(k1, (HID, C), dtype=jnp.float32) * 0.1   # fc1.weight (out, in)
    b1 = jax.random.normal(k2, (HID,), dtype=jnp.float32) * 0.1     # fc1.bias
    w2 = jax.random.normal(k3, (C, HID), dtype=jnp.float32) * 0.1   # fc2.weight (out, in)
    b2 = jax.random.normal(k4, (C,), dtype=jnp.float32) * 0.1       # fc2.bias

    out = attention_block(x, w1, b1, w2, b2)
    out = jax.block_until_ready(out)

    ref = attention_block_ref(x, w1, b1, w2, b2)
    assert out.shape == (B, C, H, W)
    assert jnp.allclose(out, ref, atol=1e-5, rtol=1e-5), "mismatch vs reference"

    print("KERNEL_OK")
</pallas_src>

<mosaic_0001>
module attributes {stable_mosaic.version = 11 : i64} {
  func.func @_attention_kernel(%arg0: i32, %arg1: memref<2x64x256xf32, #tpu.memory_space<vmem>>, %arg2: memref<64x8xf32, #tpu.memory_space<vmem>>, %arg3: memref<1x8xf32, #tpu.memory_space<vmem>>, %arg4: memref<8x64xf32, #tpu.memory_space<vmem>>, %arg5: memref<1x64xf32, #tpu.memory_space<vmem>>, %arg6: memref<2x64x256xf32, #tpu.memory_space<vmem>>) attributes {dimension_semantics = [#tpu.dimension_semantics<parallel>], iteration_bounds = array<i64: 1>, scalar_prefetch = 0 : i64, scratch_operands = 0 : i64, tpu.core_type = #tpu.core_type<tc>, window_params = [{transform_indices = @transform_0, window_bounds = array<i64: 2, 64, 256>}, {pipeline_mode = #tpu.pipeline_mode<synchronous>, transform_indices = @transform_1, window_bounds = array<i64: 64, 8>}, {pipeline_mode = #tpu.pipeline_mode<synchronous>, transform_indices = @transform_2, window_bounds = array<i64: 1, 8>}, {pipeline_mode = #tpu.pipeline_mode<synchronous>, transform_indices = @transform_3, window_bounds = array<i64: 8, 64>}, {pipeline_mode = #tpu.pipeline_mode<synchronous>, transform_indices = @transform_4, window_bounds = array<i64: 1, 64>}, {transform_indices = @transform_5, window_bounds = array<i64: 2, 64, 256>}]} {
    %c0 = arith.constant 0 : index
    %c0_0 = arith.constant 0 : index
    %c0_1 = arith.constant 0 : index
    %0 = vector.load %arg1[%c0, %c0_0, %c0_1] : memref<2x64x256xf32, #tpu.memory_space<vmem>>, vector<2x64x256xf32>
    %cst = arith.constant dense<0xFF800000> : vector<2x64xf32>
    %1 = vector.multi_reduction <maximumf>, %0, %cst [2] : vector<2x64x256xf32> to vector<2x64xf32>
    %cst_2 = arith.constant dense<0.000000e+00> : vector<2x64xf32>
    %2 = vector.multi_reduction <add>, %0, %cst_2 [2] : vector<2x64x256xf32> to vector<2x64xf32>
    %cst_3 = arith.constant 2.560000e+02 : f32
    %3 = vector.broadcast %cst_3 : f32 to vector<2x64xf32>
    %4 = arith.divf %2, %3 : vector<2x64xf32>
    %5 = tpu.concatenate %1, %4 in 0 : vector<2x64xf32>, vector<2x64xf32> -> vector<4x64xf32>
    %c0_4 = arith.constant 0 : index
    %c0_5 = arith.constant 0 : index
    %6 = vector.load %arg2[%c0_4, %c0_5] : memref<64x8xf32, #tpu.memory_space<vmem>>, vector<64x8xf32>
    %cst_6 = arith.constant dense<0.000000e+00> : vector<4x8xf32>
    %7 = tpu.matmul %5, %6, %cst_6 {dimension_numbers = #tpu.dot_dimension_numbers<[1], [0], [0], [1], [0, 0, 1, 1], [], []>} : vector<4x64xf32>, vector<64x8xf32>, vector<4x8xf32> -> vector<4x8xf32>
    %c0_7 = arith.constant 0 : index
    %c0_8 = arith.constant 0 : index
    %8 = vector.load %arg3[%c0_7, %c0_8] : memref<1x8xf32, #tpu.memory_space<vmem>>, vector<1x8xf32>
    %9 = vector.broadcast %8 : vector<1x8xf32> to vector<4x8xf32>
    %10 = arith.addf %7, %9 : vector<4x8xf32>
    %cst_9 = arith.constant 0.000000e+00 : f32
    %11 = vector.broadcast %cst_9 : f32 to vector<4x8xf32>
    %12 = arith.maximumf %10, %11 : vector<4x8xf32>
    %c0_10 = arith.constant 0 : index
    %c0_11 = arith.constant 0 : index
    %13 = vector.load %arg4[%c0_10, %c0_11] : memref<8x64xf32, #tpu.memory_space<vmem>>, vector<8x64xf32>
    %cst_12 = arith.constant dense<0.000000e+00> : vector<4x64xf32>
    %14 = tpu.matmul %12, %13, %cst_12 {dimension_numbers = #tpu.dot_dimension_numbers<[1], [0], [0], [1], [0, 0, 1, 1], [], []>} : vector<4x8xf32>, vector<8x64xf32>, vector<4x64xf32> -> vector<4x64xf32>
    %c0_13 = arith.constant 0 : index
    %c0_14 = arith.constant 0 : index
    %15 = vector.load %arg5[%c0_13, %c0_14] : memref<1x64xf32, #tpu.memory_space<vmem>>, vector<1x64xf32>
    %16 = vector.broadcast %15 : vector<1x64xf32> to vector<4x64xf32>
    %17 = arith.addf %14, %16 : vector<4x64xf32>
    %18 = vector.extract_strided_slice %17 {offsets = [0, 0], sizes = [2, 64], strides = [1, 1]} : vector<4x64xf32> to vector<2x64xf32>
    %19 = vector.extract_strided_slice %17 {offsets = [2, 0], sizes = [2, 64], strides = [1, 1]} : vector<4x64xf32> to vector<2x64xf32>
    %20 = arith.addf %18, %19 : vector<2x64xf32>
    %21 = arith.negf %20 : vector<2x64xf32>
    %22 = math.exp %21 : vector<2x64xf32>
    %cst_15 = arith.constant 1.000000e+00 : f32
    %23 = vector.broadcast %cst_15 : f32 to vector<2x64xf32>
    %24 = arith.addf %23, %22 : vector<2x64xf32>
    %25 = arith.divf %23, %24 : vector<2x64xf32>
    %26 = vector.shape_cast %25 : vector<2x64xf32> to vector<2x64x1xf32>
    %27 = vector.broadcast %26 : vector<2x64x1xf32> to vector<2x64x256xf32>
    %28 = arith.mulf %0, %27 : vector<2x64x256xf32>
    %c0_16 = arith.constant 0 : index
    %c0_17 = arith.constant 0 : index
    %c0_18 = arith.constant 0 : index
    %29 = vector.load %arg6[%c0_16, %c0_17, %c0_18] : memref<2x64x256xf32, #tpu.memory_space<vmem>>, vector<2x64x256xf32>
    tpu.vector_store %arg6[%c0_16, %c0_17, %c0_18], %28 {strides = array<i32>} : memref<2x64x256xf32, #tpu.memory_space<vmem>>, vector<2x64x256xf32>,
    return
  }
  func.func @transform_0(%arg0: i32) -> (i32, i32, i32) {
    %c0_i32 = arith.constant 0 : i32
    %c0_i32_0 = arith.constant 0 : i32
    %c0_i32_1 = arith.constant 0 : i32
    return %arg0, %c0_i32, %c0_i32_0 : i32, i32, i32
  }
  func.func @transform_1(%arg0: i32) -> (i32, i32) {
    %c0_i32 = arith.constant 0 : i32
    %c0_i32_0 = arith.constant 0 : i32
    %c0_i32_1 = arith.constant 0 : i32
    return %c0_i32, %c0_i32_0 : i32, i32
  }
  func.func @transform_2(%arg0: i32) -> (i32, i32) {
    %c0_i32 = arith.constant 0 : i32
    %c0_i32_0 = arith.constant 0 : i32
    %c0_i32_1 = arith.constant 0 : i32
    return %c0_i32, %c0_i32_0 : i32, i32
  }
  func.func @transform_3(%arg0: i32) -> (i32, i32) {
    %c0_i32 = arith.constant 0 : i32
    %c0_i32_0 = arith.constant 0 : i32
    %c0_i32_1 = arith.constant 0 : i32
    return %c0_i32, %c0_i32_0 : i32, i32
  }
  func.func @transform_4(%arg0: i32) -> (i32, i32) {
    %c0_i32 = arith.constant 0 : i32
    %c0_i32_0 = arith.constant 0 : i32
    %c0_i32_1 = arith.constant 0 : i32
    return %c0_i32, %c0_i32_0 : i32, i32
  }
  func.func @transform_5(%arg0: i32) -> (i32, i32, i32) {
    %c0_i32 = arith.constant 0 : i32
    %c0_i32_0 = arith.constant 0 : i32
    %c0_i32_1 = arith.constant 0 : i32
    return %arg0, %c0_i32, %c0_i32_0 : i32, i32, i32
  }
}

</mosaic_0001>

<llo_original>
// kernel: tpu_custom_call.1
$region0: #{tpu_custom_call.1}
  #allocation0 [shape = 'u32[]', space=smem, size = 0x4, offset = 0x4, fixed_abs, tag = 'smem constant byte address 0x4 - core index']
  #allocation1 [shape = 'u32[144,128]{1,0:T(1,128)}', space=vmem, size = 0x12000, scoped, tag = 'internal scratch']
  %s0 = inlined_call_operand.hbm [shape: f32[2,64,256], index: 0, kind: input, shape index: {}]
  %s1 = inlined_call_operand.vmem [shape: f32[64,8], index: 1, kind: input, shape index: {}]
  %s2 = inlined_call_operand.vmem [shape: f32[1,8], index: 2, kind: input, shape index: {}]
  %s3 = inlined_call_operand.vmem [shape: f32[8,64], index: 3, kind: input, shape index: {}]
  %s4 = inlined_call_operand.vmem [shape: f32[1,64], index: 4, kind: input, shape index: {}]
  %s5 = inlined_call_operand.hbm [shape: f32[2,64,256], index: 5, kind: output, shape index: {}]
  %s6 = sld [smem:[#allocation0]]
  $region34: #{tpu_custom_call.1} parent=0
    _
  %s8 = ssub.s32 1, %s6
  %s9 = scalar_select 0, %s8, %s6
  $region1: #{tpu_custom_call.1} parent=0
    #allocation2 [shape = 'u8[131072]{0}', space=vmem, size = 0x20000, scoped, tag = 'input window, operand 0, single buffered']
    #allocation3 [shape = 's32[1]{0}', space=sflag, size = 0x4, scoped, tag = 'scoped memory for tpu_custom_call.1']
    #allocation4 [shape = 's32[1]{0}', space=sflag, size = 0x4, scoped, tag = 'scoped memory for tpu_custom_call.1']
    #allocation5 [shape = 'u8[131072]{0}', space=vmem, size = 0x20000, scoped, tag = 'output window, operand 0, single buffered']
    %10 = vsyncpa [#allocation3], 0
    %11 = vsyncpa [#allocation4], 0
    // Predicated region
    $region2: #{tpu_custom_call.1} parent=1 // pred_check
      _
    $region3: #{tpu_custom_call.1} parent=1 // pred_check_branch
      %13 = sbr.rel (0) target = $region5
    $region4: #{tpu_custom_call.1} parent=1 // pred_region
      %s15 = ssub.s32 4096, 4096
      %16 = vsyncadd [#allocation3], %s15
      %s17 = sshll.u32 [#allocation2], 4
      %s18 = int_to_ptr.vmem [resolvable:$true] %s17
      %23 = dma.hbm_to_vmem [thread:$0]  %s0, 4096, %s18, [#allocation3], 256, 256, 16
    $region5: #{tpu_custom_call.1} parent=1 // pred_fallthru
      _
    // Predicated region
    $region6: #{tpu_custom_call.1} parent=1 // pred_check
      _
    $region7: #{tpu_custom_call.1} parent=1 // pred_check_branch
      %25 = sbr.rel (0) target = $region9
    $region8: #{tpu_custom_call.1} parent=1 // pred_region
      _
    $region9: #{tpu_custom_call.1} parent=1 // pred_fallthru
      _
    // Predicated region
    $region10: #{tpu_custom_call.1} parent=1 // pred_check
      _
    $region11: #{tpu_custom_call.1} parent=1 // pred_check_branch
      %27 = sbr.rel (0) target = $region13
    $region12: #{tpu_custom_call.1} parent=1 // pred_region
      _
    $region13: #{tpu_custom_call.1} parent=1 // pred_fallthru
      _
    // Predicated region
    $region14: #{tpu_custom_call.1} parent=1 // pred_check
      _
    $region15: #{tpu_custom_call.1} parent=1 // pred_check_branch
      %29 = sbr.rel (0) target = $region17
    $region16: #{tpu_custom_call.1} parent=1 // pred_region
      _
    $region17: #{tpu_custom_call.1} parent=1 // pred_fallthru
      _
    // Predicated region
    $region18: #{tpu_custom_call.1} parent=1 // pred_check
      _
    $region19: #{tpu_custom_call.1} parent=1 // pred_check_branch
      %31 = sbr.rel (0) target = $region21
    $region20: #{tpu_custom_call.1} parent=1 // pred_region
      _
    $region21: #{tpu_custom_call.1} parent=1 // pred_fallthru
      _
    // Predicated region
    $region22: #{tpu_custom_call.1} parent=1 // pred_check
      _
    $region23: #{tpu_custom_call.1} parent=1 // pred_check_branch
      %33 = sbr.rel (0) target = $region25
    $region24: #{tpu_custom_call.1} parent=1 // pred_region
      %34 = dma.done [#allocation3], 4096
    $region25: #{tpu_custom_call.1} parent=1 // pred_fallthru
      _
    %v35 = vld [vmem:[#allocation2] sm:$0xff]
    %v36 = vld [vmem:[#allocation2 + $0x8] sm:$0xff]
    %v37 = vld [vmem:[#allocation2 + $0x10] sm:$0xff]
    %v38 = vld [vmem:[#allocation2 + $0x18] sm:$0xff]
    %v39 = vld [vmem:[#allocation2 + $0x20] sm:$0xff]
    %v40 = vld [vmem:[#allocation2 + $0x28] sm:$0xff]
    %v41 = vld [vmem:[#allocation2 + $0x30] sm:$0xff]
    %v42 = vld [vmem:[#allocation2 + $0x38] sm:$0xff]
    %v43 = vld [vmem:[#allocation2 + $0x40] sm:$0xff]
    %v44 = vld [vmem:[#allocation2 + $0x48] sm:$0xff]
    %v45 = vld [vmem:[#allocation2 + $0x50] sm:$0xff]
    %v46 = vld [vmem:[#allocation2 + $0x58] sm:$0xff]
    %v47 = vld [vmem:[#allocation2 + $0x60] sm:$0xff]
    %v48 = vld [vmem:[#allocation2 + $0x68] sm:$0xff]
    %v49 = vld [vmem:[#allocation2 + $0x70] sm:$0xff]
    %v50 = vld [vmem:[#allocation2 + $0x78] sm:$0xff]
    %v51 = vld [vmem:[#allocation2 + $0x80] sm:$0xff]
    %v52 = vld [vmem:[#allocation2 + $0x88] sm:$0xff]
    %v53 = vld [vmem:[#allocation2 + $0x90] sm:$0xff]
    %v54 = vld [vmem:[#allocation2 + $0x98] sm:$0xff]
    %v55 = vld [vmem:[#allocation2 + $0xa0] sm:$0xff]
    %v56 = vld [vmem:[#allocation2 + $0xa8] sm:$0xff]
    %v57 = vld [vmem:[#allocation2 + $0xb0] sm:$0xff]
    %v58 = vld [vmem:[#allocation2 + $0xb8] sm:$0xff]
    %v59 = vld [vmem:[#allocation2 + $0xc0] sm:$0xff]
    %v60 = vld [vmem:[#allocation2 + $0xc8] sm:$0xff]
    %v61 = vld [vmem:[#allocation2 + $0xd0] sm:$0xff]
    %v62 = vld [vmem:[#allocation2 + $0xd8] sm:$0xff]
    %v63 = vld [vmem:[#allocation2 + $0xe0] sm:$0xff]
    %v64 = vld [vmem:[#allocation2 + $0xe8] sm:$0xff]
    %v65 = vld [vmem:[#allocation2 + $0xf0] sm:$0xff]
    %v66 = vld [vmem:[#allocation2 + $0xf8] sm:$0xff]
    %v67 = vmax.f32 %v35, %v36
    %68 = vmax.xlane.f32.xlu0 %v67
    %v69 = vpop.xlane.xlu0 %68
    %v70 = vmax.f32 %v37, %v38
    %71 = vmax.xlane.f32.xlu0 %v70
    %v72 = vpop.xlane.xlu0 %71
    %v73 = vmax.f32 %v39, %v40
    %74 = vmax.xlane.f32.xlu0 %v73
    %v75 = vpop.xlane.xlu0 %74
    %v76 = vmax.f32 %v41, %v42
    %77 = vmax.xlane.f32.xlu0 %v76
    %v78 = vpop.xlane.xlu0 %77
    %v79 = vmax.f32 %v43, %v44
    %80 = vmax.xlane.f32.xlu0 %v79
    %v81 = vpop.xlane.xlu0 %80
    %v82 = vmax.f32 %v45, %v46
    %83 = vmax.xlane.f32.xlu0 %v82
    %v84 = vpop.xlane.xlu0 %83
    %v85 = vmax.f32 %v47, %v48
    %86 = vmax.xlane.f32.xlu0 %v85
    %v87 = vpop.xlane.xlu0 %86
    %v88 = vmax.f32 %v49, %v50
    %89 = vmax.xlane.f32.xlu0 %v88
    %v90 = vpop.xlane.xlu0 %89
    %v91 = vmax.f32 %v51, %v52
    %92 = vmax.xlane.f32.xlu0 %v91
    %v93 = vpop.xlane.xlu0 %92
    %v94 = vmax.f32 %v53, %v54
    %95 = vmax.xlane.f32.xlu0 %v94
    %v96 = vpop.xlane.xlu0 %95
    %v97 = vmax.f32 %v55, %v56
    %98 = vmax.xlane.f32.xlu0 %v97
    %v99 = vpop.xlane.xlu0 %98
    %v100 = vmax.f32 %v57, %v58
    %101 = vmax.xlane.f32.xlu0 %v100
    %v102 = vpop.xlane.xlu0 %101
    %v103 = vmax.f32 %v59, %v60
    %104 = vmax.xlane.f32.xlu0 %v103
    %v105 = vpop.xlane.xlu0 %104
    %v106 = vmax.f32 %v61, %v62
    %107 = vmax.xlane.f32.xlu0 %v106
    %v108 = vpop.xlane.xlu0 %107
    %v109 = vmax.f32 %v63, %v64
    %110 = vmax.xlane.f32.xlu0 %v109
    %v111 = vpop.xlane.xlu0 %110
    %v112 = vmax.f32 %v65, %v66
    %113 = vmax.xlane.f32.xlu0 %v112
    %v114 = vpop.xlane.xlu0 %113
    %v115 = vadd.f32 %v35, %v36
    %116 = vadd.xlane.f32.xlu0 %v115
    %v117 = vpop.xlane.xlu0 %116
    %v118 = vadd.f32 %v37, %v38
    %119 = vadd.xlane.f32.xlu0 %v118
    %v120 = vpop.xlane.xlu0 %119
    %v121 = vadd.f32 %v39, %v40
    %122 = vadd.xlane.f32.xlu0 %v121
    %v123 = vpop.xlane.xlu0 %122
    %v124 = vadd.f32 %v41, %v42
    %125 = vadd.xlane.f32.xlu0 %v124
    %v126 = vpop.xlane.xlu0 %125
    %v127 = vadd.f32 %v43, %v44
    %128 = vadd.xlane.f32.xlu0 %v127
    %v129 = vpop.xlane.xlu0 %128
    %v130 = vadd.f32 %v45, %v46
    %131 = vadd.xlane.f32.xlu0 %v130
    %v132 = vpop.xlane.xlu0 %131
    %v133 = vadd.f32 %v47, %v48
    %134 = vadd.xlane.f32.xlu0 %v133
    %v135 = vpop.xlane.xlu0 %134
    %v136 = vadd.f32 %v49, %v50
    %137 = vadd.xlane.f32.xlu0 %v136
    %v138 = vpop.xlane.xlu0 %137
    %v139 = vadd.f32 %v51, %v52
    %140 = vadd.xlane.f32.xlu0 %v139
    %v141 = vpop.xlane.xlu0 %140
    %v142 = vadd.f32 %v53, %v54
    %143 = vadd.xlane.f32.xlu0 %v142
    %v144 = vpop.xlane.xlu0 %143
    %v145 = vadd.f32 %v55, %v56
    %146 = vadd.xlane.f32.xlu0 %v145
    %v147 = vpop.xlane.xlu0 %146
    %v148 = vadd.f32 %v57, %v58
    %149 = vadd.xlane.f32.xlu0 %v148
    %v150 = vpop.xlane.xlu0 %149
    %v151 = vadd.f32 %v59, %v60
    %152 = vadd.xlane.f32.xlu0 %v151
    %v153 = vpop.xlane.xlu0 %152
    %v154 = vadd.f32 %v61, %v62
    %155 = vadd.xlane.f32.xlu0 %v154
    %v156 = vpop.xlane.xlu0 %155
    %v157 = vadd.f32 %v63, %v64
    %158 = vadd.xlane.f32.xlu0 %v157
    %v159 = vpop.xlane.xlu0 %158
    %v160 = vadd.f32 %v65, %v66
    %161 = vadd.xlane.f32.xlu0 %v160
    %v162 = vpop.xlane.xlu0 %161
    %v163 = vrcp.pop 256.0
    %v164 = vmul.f32 %v117, %v163
    %v165 = vmul.f32 %v120, %v163
    %v166 = vmul.f32 %v123, %v163
    %v167 = vmul.f32 %v126, %v163
    %v168 = vmul.f32 %v129, %v163
    %v169 = vmul.f32 %v132, %v163
    %v170 = vmul.f32 %v135, %v163
    %v171 = vmul.f32 %v138, %v163
    %v172 = vmul.f32 %v141, %v163
    %v173 = vmul.f32 %v144, %v163
    %v174 = vmul.f32 %v147, %v163
    %v175 = vmul.f32 %v150, %v163
    %v176 = vmul.f32 %v153, %v163
    %v177 = vmul.f32 %v156, %v163
    %v178 = vmul.f32 %v159, %v163
    %v179 = vmul.f32 %v162, %v163
    %v196 = vlaneseq
    %v197 = vand.u32 %v196, 127
    %v198 = vlaneseq
    %v199 = vshrl.u32 %v198, 7
    %v200 = vsub.s32 %v197, %v199
    %v201 = vrot.slane %v69, %v200
    %v202 = vadd.s32 %v197, 4294967288
    %v203 = vlaneseq
    %v204 = vshrl.u32 %v203, 7
    %v205 = vsub.s32 %v202, %v204
    %v206 = vrot.slane %v72, %v205
    %vm207 = vcmask 130112
    %v208 = vsel %vm207, %v206, %v201
    %v209 = vadd.s32 %v197, 4294967280
    %v210 = vlaneseq
    %v211 = vshrl.u32 %v210, 7
    %v212 = vsub.s32 %v209, %v211
    %v213 = vrot.slane %v75, %v212
    %vm214 = vcmask 195712
    %v215 = vsel %vm214, %v213, %v208
    %v216 = vadd.s32 %v197, 4294967272
    %v217 = vlaneseq
    %v218 = vshrl.u32 %v217, 7
    %v219 = vsub.s32 %v216, %v218
    %v220 = vrot.slane %v78, %v219
    %vm221 = vcmask 261312
    %v222 = vsel %vm221, %v220, %v215
    %v223 = vadd.s32 %v197, 4294967264
    %v224 = vlaneseq
    %v225 = vshrl.u32 %v224, 7
    %v226 = vsub.s32 %v223, %v225
    %v227 = vrot.slane %v81, %v226
    %vm228 = vcmask 326912
    %v229 = vsel %vm228, %v227, %v222
    %v230 = vadd.s32 %v197, 4294967256
    %v231 = vlaneseq
    %v232 = vshrl.u32 %v231, 7
    %v233 = vsub.s32 %v230, %v232
    %v234 = vrot.slane %v84, %v233
    %vm235 = vcmask 392512
    %v236 = vsel %vm235, %v234, %v229
    %v237 = vadd.s32 %v197, 4294967248
    %v238 = vlaneseq
    %v239 = vshrl.u32 %v238, 7
    %v240 = vsub.s32 %v237, %v239
    %v241 = vrot.slane %v87, %v240
    %vm242 = vcmask 458112
    %v243 = vsel %vm242, %v241, %v236
    %v244 = vadd.s32 %v197, 4294967240
    %v245 = vlaneseq
    %v246 = vshrl.u32 %v245, 7
    %v247 = vsub.s32 %v244, %v246
    %v248 = vrot.slane %v90, %v247
    %vm249 = vcmask 523712
    %v250 = vsel %vm249, %v248, %v243
    %v251 = vlaneseq
    %v252 = vshrl.u32 %v251, 7
    %v253 = vsub.s32 %v197, %v252
    %v254 = vrot.slane %v93, %v253
    %v255 = vlaneseq
    %v256 = vshrl.u32 %v255, 7
    %v257 = vsub.s32 %v202, %v256
    %v258 = vrot.slane %v96, %v257
    %v259 = vsel %vm207, %v258, %v254
    %v260 = vlaneseq
    %v261 = vshrl.u32 %v260, 7
    %v262 = vsub.s32 %v209, %v261
    %v263 = vrot.slane %v99, %v262
    %v264 = vsel %vm214, %v263, %v259
    %v265 = vlaneseq
    %v266 = vshrl.u32 %v265, 7
    %v267 = vsub.s32 %v216, %v266
    %v268 = vrot.slane %v102, %v267
    %v269 = vsel %vm221, %v268, %v264
    %v270 = vlaneseq
    %v271 = vshrl.u32 %v270, 7
    %v272 = vsub.s32 %v223, %v271
    %v273 = vrot.slane %v105, %v272
    %v274 = vsel %vm228, %v273, %v269
    %v275 = vlaneseq
    %v276 = vshrl.u32 %v275, 7
    %v277 = vsub.s32 %v230, %v276
    %v278 = vrot.slane %v108, %v277
    %v279 = vsel %vm235, %v278, %v274
    %v280 = vlaneseq
    %v281 = vshrl.u32 %v280, 7
    %v282 = vsub.s32 %v237, %v281
    %v283 = vrot.slane %v111, %v282
    %v284 = vsel %vm242, %v283, %v279
    %v285 = vlaneseq
    %v286 = vshrl.u32 %v285, 7
    %v287 = vsub.s32 %v244, %v286
    %v288 = vrot.slane %v114, %v287
    %v289 = vsel %vm249, %v288, %v284
    %vm290 = vcmask 1041409
    %v291 = vsel %vm290, %v289, %v250
    %v309 = vlaneseq
    %v310 = vshrl.u32 %v309, 7
    %v311 = vsub.s32 %v197, %v310
    %v312 = vrot.slane %v164, %v311
    %v313 = vlaneseq
    %v314 = vshrl.u32 %v313, 7
    %v315 = vsub.s32 %v202, %v314
    %v316 = vrot.slane %v165, %v315
    %v317 = vsel %vm207, %v316, %v312
    %v318 = vlaneseq
    %v319 = vshrl.u32 %v318, 7
    %v320 = vsub.s32 %v209, %v319
    %v321 = vrot.slane %v166, %v320
    %v322 = vsel %vm214, %v321, %v317
    %v323 = vlaneseq
    %v324 = vshrl.u32 %v323, 7
    %v325 = vsub.s32 %v216, %v324
    %v326 = vrot.slane %v167, %v325
    %v327 = vsel %vm221, %v326, %v322
    %v328 = vlaneseq
    %v329 = vshrl.u32 %v328, 7
    %v330 = vsub.s32 %v223, %v329
    %v331 = vrot.slane %v168, %v330
    %v332 = vsel %vm228, %v331, %v327
    %v333 = vlaneseq
    %v334 = vshrl.u32 %v333, 7
    %v335 = vsub.s32 %v230, %v334
    %v336 = vrot.slane %v169, %v335
    %v337 = vsel %vm235, %v336, %v332
    %v338 = vlaneseq
    %v339 = vshrl.u32 %v338, 7
    %v340 = vsub.s32 %v237, %v339
    %v341 = vrot.slane %v170, %v340
    %v342 = vsel %vm242, %v341, %v337
    %v343 = vlaneseq
    %v344 = vshrl.u32 %v343, 7
    %v345 = vsub.s32 %v244, %v344
    %v346 = vrot.slane %v171, %v345
    %v347 = vsel %vm249, %v346, %v342
    %v348 = vlaneseq
    %v349 = vshrl.u32 %v348, 7
    %v350 = vsub.s32 %v197, %v349
    %v351 = vrot.slane %v172, %v350
    %v352 = vlaneseq
    %v353 = vshrl.u32 %v352, 7
    %v354 = vsub.s32 %v202, %v353
    %v355 = vrot.slane %v173, %v354
    %v356 = vsel %vm207, %v355, %v351
    %v357 = vlaneseq
    %v358 = vshrl.u32 %v357, 7
    %v359 = vsub.s32 %v209, %v358
    %v360 = vrot.slane %v174, %v359
    %v361 = vsel %vm214, %v360, %v356
    %v362 = vlaneseq
    %v363 = vshrl.u32 %v362, 7
    %v364 = vsub.s32 %v216, %v363
    %v365 = vrot.slane %v175, %v364
    %v366 = vsel %vm221, %v365, %v361
    %v367 = vlaneseq
    %v368 = vshrl.u32 %v367, 7
    %v369 = vsub.s32 %v223, %v368
    %v370 = vrot.slane %v176, %v369
    %v371 = vsel %vm228, %v370, %v366
    %v372 = vlaneseq
    %v373 = vshrl.u32 %v372, 7
    %v374 = vsub.s32 %v230, %v373
    %v375 = vrot.slane %v177, %v374
    %v376 = vsel %vm235, %v375, %v371
    %v377 = vlaneseq
    %v378 = vshrl.u32 %v377, 7
    %v379 = vsub.s32 %v237, %v378
    %v380 = vrot.slane %v178, %v379
    %v381 = vsel %vm242, %v380, %v376
    %v382 = vlaneseq
    %v383 = vshrl.u32 %v382, 7
    %v384 = vsub.s32 %v244, %v383
    %v385 = vrot.slane %v179, %v384
    %v386 = vsel %vm249, %v385, %v381
    %vm387 = vcmask 1043459
    %v388 = vsel %vm387, %v386, %v347
    %vm390 = vcmask 1041408
    %v391 = vsel %vm390, %v291, %v388
    %v392 = vld [vmem:[%s1] sm:$0xff]
    %v393 = vld [vmem:[%s1 + $0x8] sm:$0xff]
    %v394 = vld [vmem:[%s1 + $0x10] sm:$0xff]
    %v395 = vld [vmem:[%s1 + $0x18] sm:$0xff]
    %v396 = vld [vmem:[%s1 + $0x20] sm:$0xff]
    %v397 = vld [vmem:[%s1 + $0x28] sm:$0xff]
    %v398 = vld [vmem:[%s1 + $0x30] sm:$0xff]
    %v399 = vld [vmem:[%s1 + $0x38] sm:$0xff]
    %v400 = vld [vmem:[%s2] sm:$0x1]
    %v402 = vlaneseq
    %v403 = vshrl.u32 %v402, 7
    %v404 = vsub.s32 0, %v403
    %v405 = vrot.slane %v400, %v404
    %vm407 = vcmask 523264
    %v409 = vsel %vm407, %v391, 0
    %411 = vmatprep.subr.mxu0 0.0
    %412 = vmatpush1.msra.mxu0 %v392
    %413 = vmatprep.subr.mxu0 0.0
    %414 = vmatpush1.msra.mxu0 %v393
    %415 = vmatprep.subr.mxu0 0.0
    %416 = vmatpush1.msra.mxu0 %v394
    %417 = vmatprep.subr.mxu0 0.0
    %418 = vmatpush1.msra.mxu0 %v395
    %419 = vmatprep.subr.mxu0 0.0
    %420 = vmatpush1.msra.mxu0 %v396
    %421 = vmatprep.subr.mxu0 0.0
    %422 = vmatpush1.msra.mxu0 %v397
    %423 = vmatprep.subr.mxu0 0.0
    %424 = vmatpush1.msra.mxu0 %v398
    %425 = vmatprep.subr.mxu0 0.0
    %426 = vmatpush1.msra.mxu0 %v399
    %427 = vmatprep.subr.mxu0 0.0
    %428 = vmatpush1.msra.mxu0 0.0
    %429 = vmatprep.subr.mxu0 0.0
    %430 = vmatpush1.msra.mxu0 0.0
    %431 = vmatprep.subr.mxu0 0.0
    %432 = vmatpush1.msra.mxu0 0.0
    %433 = vmatprep.subr.mxu0 0.0
    %434 = vmatpush1.msra.mxu0 0.0
    %435 = vmatprep.subr.mxu0 0.0
    %436 = vmatpush1.msra.mxu0 0.0
    %437 = vmatprep.subr.mxu0 0.0
    %438 = vmatpush1.msra.mxu0 0.0
    %439 = vmatprep.subr.mxu0 0.0
    %440 = vmatpush1.msra.mxu0 0.0
    %441 = vmatprep.subr.mxu0 0.0
    %442 = vmatpush1.msra.mxu0 0.0
    %443 = vmatprep.subr.mxu0 0.0
    %444 = vmatpush1.msra.mxu0 0.0
    %445 = vmatprep.subr.mxu0 0.0
    %446 = vmatpush1.msra.mxu0 0.0
    %447 = vmatprep.subr.mxu0 0.0
    %448 = vmatpush1.msra.mxu0 0.0
    %449 = vmatprep.subr.mxu0 0.0
    %450 = vmatpush1.msra.mxu0 0.0
    %451 = vmatprep.subr.mxu0 0.0
    %452 = vmatpush1.msra.mxu0 0.0
    %453 = vmatprep.subr.mxu0 0.0
    %454 = vmatpush1.msra.mxu0 0.0
    %455 = vmatprep.subr.mxu0 0.0
    %456 = vmatpush1.msra.mxu0 0.0
    %457 = vmatprep.subr.mxu0 0.0
    %458 = vmatpush1.msra.mxu0 0.0
    %459 = vmatprep.subr.mxu0 0.0
    %460 = vmatpush1.msra.mxu0 0.0
    %461 = vmatprep.subr.mxu0 0.0
    %462 = vmatpush1.msra.mxu0 0.0
    %463 = vmatprep.subr.mxu0 0.0
    %464 = vmatpush1.msra.mxu0 0.0
    %465 = vmatprep.subr.mxu0 0.0
    %466 = vmatpush1.msra.mxu0 0.0
    %467 = vmatprep.subr.mxu0 0.0
    %468 = vmatpush1.msra.mxu0 0.0
    %469 = vmatprep.subr.mxu0 0.0
    %470 = vmatpush1.msra.mxu0 0.0
    %471 = vmatprep.subr.mxu0 0.0
    %472 = vmatpush1.msra.mxu0 0.0
    %473 = vmatprep.subr.mxu0 0.0
    %474 = vmatpush1.msra.mxu0 0.0
    %475 = vmatprep.mubr.f32.mxu0 0.0
    %476 = vmatmul.mubr.f32.gmra.mrb[0].mxu0 %v409
    %v477 = vpop.f32.mrb[0].mxu0
    %v478 = vadd.f32 %v405, %v477
    %v479 = vpop.f32.mrb[0].mxu0
    %480 = vdwg.mxu0
    %v481 = vmax.f32 %v478, 0.0
    %v482 = vld [vmem:[%s3] sm:$0xff]
    %v483 = vld [vmem:[%s4] sm:$0x1]
    %v485 = vlaneseq
    %v486 = vshrl.u32 %v485, 7
    %v487 = vsub.s32 0, %v486
    %v488 = vrot.slane %v483, %v487
    %vm490 = vcmask 64512
    %v492 = vsel %vm490, %v481, 0
    %494 = vmatprep.subr.mxu0 0.0
    %495 = vmatpush1.msra.mxu0 %v482
    %496 = vmatprep.subr.mxu0 0.0
    %497 = vmatpush1.msra.mxu0 0.0
    %498 = vmatprep.subr.mxu0 0.0
    %499 = vmatpush1.msra.mxu0 0.0
    %500 = vmatprep.subr.mxu0 0.0
    %501 = vmatpush1.msra.mxu0 0.0
    %502 = vmatprep.subr.mxu0 0.0
    %503 = vmatpush1.msra.mxu0 0.0
    %504 = vmatprep.subr.mxu0 0.0
    %505 = vmatpush1.msra.mxu0 0.0
    %506 = vmatprep.subr.mxu0 0.0
    %507 = vmatpush1.msra.mxu0 0.0
    %508 = vmatprep.subr.mxu0 0.0
    %509 = vmatpush1.msra.mxu0 0.0
    %510 = vmatprep.subr.mxu0 0.0
    %511 = vmatpush1.msra.mxu0 0.0
    %512 = vmatprep.subr.mxu0 0.0
    %513 = vmatpush1.msra.mxu0 0.0
    %514 = vmatprep.subr.mxu0 0.0
    %515 = vmatpush1.msra.mxu0 0.0
    %516 = vmatprep.subr.mxu0 0.0
    %517 = vmatpush1.msra.mxu0 0.0
    %518 = vmatprep.subr.mxu0 0.0
    %519 = vmatpush1.msra.mxu0 0.0
    %520 = vmatprep.subr.mxu0 0.0
    %521 = vmatpush1.msra.mxu0 0.0
    %522 = vmatprep.subr.mxu0 0.0
    %523 = vmatpush1.msra.mxu0 0.0
    %524 = vmatprep.subr.mxu0 0.0
    %525 = vmatpush1.msra.mxu0 0.0
    %526 = vmatprep.subr.mxu0 0.0
    %527 = vmatpush1.msra.mxu0 0.0
    %528 = vmatprep.subr.mxu0 0.0
    %529 = vmatpush1.msra.mxu0 0.0
    %530 = vmatprep.subr.mxu0 0.0
    %531 = vmatpush1.msra.mxu0 0.0
    %532 = vmatprep.subr.mxu0 0.0
    %533 = vmatpush1.msra.mxu0 0.0
    %534 = vmatprep.subr.mxu0 0.0
    %535 = vmatpush1.msra.mxu0 0.0
    %536 = vmatprep.subr.mxu0 0.0
    %537 = vmatpush1.msra.mxu0 0.0
    %538 = vmatprep.subr.mxu0 0.0
    %539 = vmatpush1.msra.mxu0 0.0
    %540 = vmatprep.subr.mxu0 0.0
    %541 = vmatpush1.msra.mxu0 0.0
    %542 = vmatprep.subr.mxu0 0.0
    %543 = vmatpush1.msra.mxu0 0.0
    %544 = vmatprep.subr.mxu0 0.0
    %545 = vmatpush1.msra.mxu0 0.0
    %546 = vmatprep.subr.mxu0 0.0
    %547 = vmatpush1.msra.mxu0 0.0
    %548 = vmatprep.subr.mxu0 0.0
    %549 = vmatpush1.msra.mxu0 0.0
    %550 = vmatprep.subr.mxu0 0.0
    %551 = vmatpush1.msra.mxu0 0.0
    %552 = vmatprep.subr.mxu0 0.0
    %553 = vmatpush1.msra.mxu0 0.0
    %554 = vmatprep.subr.mxu0 0.0
    %555 = vmatpush1.msra.mxu0 0.0
    %556 = vmatprep.subr.mxu0 0.0
    %557 = vmatpush1.msra.mxu0 0.0
    %558 = vmatprep.mubr.f32.mxu0 0.0
    %559 = vmatmul.mubr.f32.gmra.mrb[0].mxu0 %v492
    %v560 = vpop.f32.mrb[0].mxu0
    %v561 = vadd.f32 %v488, %v560
    %v562 = vpop.f32.mrb[0].mxu0
    %563 = vdwg.mxu0
    %v565 = vrot.slane %v561, 2
    %v567 = vadd.f32 %v561, %v565
    %v568 = vxor.u32 %v567, 2147483648
    %v569 = vmul.f32 %v568, 1.442695
    %v570 = vpow.pop %v569
    %v571 = vadd.f32 %v570, 1.0
    %v572 = vrcp.pop %v571
    %v573 = vmul.f32 1.0, %v572
    %v574 = vlaneseq
    %v575 = vshrl.u32 %v574, 7
    %v576 = vsub.s32 0, %v575
    %v577 = vrot.slane %v573, %v576
    %579 = vbcast.lane.b32.xlu0 %v577, 256
    %v580 = vpop.permute.xlu0 %579
    %s582 = sor.u32 256, 8
    %583 = vbcast.lane.b32.xlu0 %v577, %s582
    %v584 = vpop.permute.xlu0 %583
    %s586 = sor.u32 256, 16
    %587 = vbcast.lane.b32.xlu0 %v577, %s586
    %v588 = vpop.permute.xlu0 %587
    %s590 = sor.u32 256, 24
    %591 = vbcast.lane.b32.xlu0 %v577, %s590
    %v592 = vpop.permute.xlu0 %591
    %s594 = sor.u32 256, 32
    %595 = vbcast.lane.b32.xlu0 %v577, %s594
    %v596 = vpop.permute.xlu0 %595
    %s598 = sor.u32 256, 40
    %599 = vbcast.lane.b32.xlu0 %v577, %s598
    %v600 = vpop.permute.xlu0 %599
    %s602 = sor.u32 256, 48
    %603 = vbcast.lane.b32.xlu0 %v577, %s602
    %v604 = vpop.permute.xlu0 %603
    %s606 = sor.u32 256, 56
    %607 = vbcast.lane.b32.xlu0 %v577, %s606
    %v608 = vpop.permute.xlu0 %607
    %v609 = vlaneseq
    %v610 = vshrl.u32 %v609, 7
    %v611 = vsub.s32 1, %v610
    %v612 = vrot.slane %v573, %v611
    %614 = vbcast.lane.b32.xlu0 %v612, 256
    %v615 = vpop.permute.xlu0 %614
    %s617 = sor.u32 256, 8
    %618 = vbcast.lane.b32.xlu0 %v612, %s617
    %v619 = vpop.permute.xlu0 %618
    %s621 = sor.u32 256, 16
    %622 = vbcast.lane.b32.xlu0 %v612, %s621
    %v623 = vpop.permute.xlu0 %622
    %s625 = sor.u32 256, 24
    %626 = vbcast.lane.b32.xlu0 %v612, %s625
    %v627 = vpop.permute.xlu0 %626
    %s629 = sor.u32 256, 32
    %630 = vbcast.lane.b32.xlu0 %v612, %s629
    %v631 = vpop.permute.xlu0 %630
    %s633 = sor.u32 256, 40
    %634 = vbcast.lane.b32.xlu0 %v612, %s633
    %v635 = vpop.permute.xlu0 %634
    %s637 = sor.u32 256, 48
    %638 = vbcast.lane.b32.xlu0 %v612, %s637
    %v639 = vpop.permute.xlu0 %638
    %s641 = sor.u32 256, 56
    %642 = vbcast.lane.b32.xlu0 %v612, %s641
    %v643 = vpop.permute.xlu0 %642
    %v644 = vmul.f32 %v35, %v580
    %v645 = vmul.f32 %v36, %v580
    %v646 = vmul.f32 %v37, %v584
    %v647 = vmul.f32 %v38, %v584
    %v648 = vmul.f32 %v39, %v588
    %v649 = vmul.f32 %v40, %v588
    %v650 = vmul.f32 %v41, %v592
    %v651 = vmul.f32 %v42, %v592
    %v652 = vmul.f32 %v43, %v596
    %v653 = vmul.f32 %v44, %v596
    %v654 = vmul.f32 %v45, %v600
    %v655 = vmul.f32 %v46, %v600
    %v656 = vmul.f32 %v47, %v604
    %v657 = vmul.f32 %v48, %v604
    %v658 = vmul.f32 %v49, %v608
    %v659 = vmul.f32 %v50, %v608
    %v660 = vmul.f32 %v51, %v615
    %v661 = vmul.f32 %v52, %v615
    %v662 = vmul.f32 %v53, %v619
    %v663 = vmul.f32 %v54, %v619
    %v664 = vmul.f32 %v55, %v623
    %v665 = vmul.f32 %v56, %v623
    %v666 = vmul.f32 %v57, %v627
    %v667 = vmul.f32 %v58, %v627
    %v668 = vmul.f32 %v59, %v631
    %v669 = vmul.f32 %v60, %v631
    %v670 = vmul.f32 %v61, %v635
    %v671 = vmul.f32 %v62, %v635
    %v672 = vmul.f32 %v63, %v639
    %v673 = vmul.f32 %v64, %v639
    %v674 = vmul.f32 %v65, %v643
    %v675 = vmul.f32 %v66, %v643
    %676 = vst [vmem:[#allocation5] sm:$0xff] %v644
    %677 = vst [vmem:[#allocation5 + $0x8] sm:$0xff] %v645
    %678 = vst [vmem:[#allocation5 + $0x10] sm:$0xff] %v646
    %679 = vst [vmem:[#allocation5 + $0x18] sm:$0xff] %v647
    %680 = vst [vmem:[#allocation5 + $0x20] sm:$0xff] %v648
    %681 = vst [vmem:[#allocation5 + $0x28] sm:$0xff] %v649
    %682 = vst [vmem:[#allocation5 + $0x30] sm:$0xff] %v650
    %683 = vst [vmem:[#allocation5 + $0x38] sm:$0xff] %v651
    %684 = vst [vmem:[#allocation5 + $0x40] sm:$0xff] %v652
    %685 = vst [vmem:[#allocation5 + $0x48] sm:$0xff] %v653
    %686 = vst [vmem:[#allocation5 + $0x50] sm:$0xff] %v654
    %687 = vst [vmem:[#allocation5 + $0x58] sm:$0xff] %v655
    %688 = vst [vmem:[#allocation5 + $0x60] sm:$0xff] %v656
    %689 = vst [vmem:[#allocation5 + $0x68] sm:$0xff] %v657
    %690 = vst [vmem:[#allocation5 + $0x70] sm:$0xff] %v658
    %691 = vst [vmem:[#allocation5 + $0x78] sm:$0xff] %v659
    %692 = vst [vmem:[#allocation5 + $0x80] sm:$0xff] %v660
    %693 = vst [vmem:[#allocation5 + $0x88] sm:$0xff] %v661
    %694 = vst [vmem:[#allocation5 + $0x90] sm:$0xff] %v662
    %695 = vst [vmem:[#allocation5 + $0x98] sm:$0xff] %v663
    %696 = vst [vmem:[#allocation5 + $0xa0] sm:$0xff] %v664
    %697 = vst [vmem:[#allocation5 + $0xa8] sm:$0xff] %v665
    %698 = vst [vmem:[#allocation5 + $0xb0] sm:$0xff] %v666
    %699 = vst [vmem:[#allocation5 + $0xb8] sm:$0xff] %v667
    %700 = vst [vmem:[#allocation5 + $0xc0] sm:$0xff] %v668
    %701 = vst [vmem:[#allocation5 + $0xc8] sm:$0xff] %v669
    %702 = vst [vmem:[#allocation5 + $0xd0] sm:$0xff] %v670
    %703 = vst [vmem:[#allocation5 + $0xd8] sm:$0xff] %v671
    %704 = vst [vmem:[#allocation5 + $0xe0] sm:$0xff] %v672
    %705 = vst [vmem:[#allocation5 + $0xe8] sm:$0xff] %v673
    %706 = vst [vmem:[#allocation5 + $0xf0] sm:$0xff] %v674
    %707 = vst [vmem:[#allocation5 + $0xf8] sm:$0xff] %v675
    // Predicated region
    $region26: #{tpu_custom_call.1} parent=1 // pred_check
      _
    $region27: #{tpu_custom_call.1} parent=1 // pred_check_branch
      %709 = sbr.rel (0) target = $region29
    $region28: #{tpu_custom_call.1} parent=1 // pred_region
      %s711 = ssub.s32 4096, 4096
      %712 = vsyncadd [#allocation4], %s711
      %s713 = sshll.u32 [#allocation5], 4
      %s714 = int_to_ptr.vmem [resolvable:$true] %s713
      %719 = dma.vmem_to_hbm [thread:$0]  %s714, 4096, %s5, [#allocation4], 256, 256, 16
    $region29: #{tpu_custom_call.1} parent=1 // pred_fallthru
      _
    // Predicated region
    $region30: #{tpu_custom_call.1} parent=1 // pred_check
      _
    $region31: #{tpu_custom_call.1} parent=1 // pred_check_branch
      %721 = sbr.rel (0) target = $region33
    $region32: #{tpu_custom_call.1} parent=1 // pred_region
      %722 = dma.done [#allocation4], 4096
    $region33: #{tpu_custom_call.1} parent=1 // pred_fallthru
      _
    %723 = vsyncpa [#allocation3], 1
    %724 = vsyncpa [#allocation4], 1

</llo_original>
